<compile_context>
chip_gen: v5e
topology: v5e:2x2
jax: 0.10.0
libtpu: 0.0.40
codegen_flags: <defaults>
</compile_context>

<pallas_src>
import jax
import jax.numpy as jnp
from jax import lax
from jax.experimental import pallas as pl
from jax.experimental.pallas import tpu as pltpu

n_embd = 384        # embedding dim from the reference module
block_size = 256    # max causal context from the reference module
dropout_p = 0.2     # dropout prob from the reference module (identity at inference)

NEG_BIG = -1e30     # finite large-negative causal fill (robust vs -inf edge cases)


def head_kernel(x_ref, wkqv_ref, o_ref):
    """One grid step = one batch element. All hot-path compute lives here."""
    x = x_ref[...]                      # (T, C)  bf16
    w = wkqv_ref[...]                   # (C, 3H) bf16, = [Wk | Wq/sqrt(H) | Wv]
    T = x_ref.shape[0]
    H = wkqv_ref.shape[1] // 3

    # Single fused projection on the MXU (bf16 operands, f32 accumulate).
    proj = jnp.dot(x, w, preferred_element_type=jnp.float32)   # (T, 3H) f32
    k = proj[:, :H]
    q = proj[:, H:2 * H]                # score scale already folded into Wq
    v = proj[:, 2 * H:]

    # Attention scores q @ k^T without materializing k.T: contract on H.
    wei = lax.dot_general(
        q.astype(jnp.bfloat16), k.astype(jnp.bfloat16),
        dimension_numbers=(((1,), (1,)), ((), ())),
        preferred_element_type=jnp.float32)                    # (T, T) f32

    # Causal mask (tril): one compare + one select, finite negative fill.
    row = lax.broadcasted_iota(jnp.int32, (T, T), 0)
    col = lax.broadcasted_iota(jnp.int32, (T, T), 1)
    wei = jnp.where(col <= row, wei, NEG_BIG)

    # Numerically stable softmax in f32; divide -> EUP reciprocal + multiply.
    wei = wei - jnp.max(wei, axis=-1, keepdims=True)
    p = jnp.exp(wei)
    inv = pl.reciprocal(jnp.sum(p, axis=-1, keepdims=True), approx=True)
    p = p * inv

    # TODO(synk): nn.Dropout(0.2) is identity at inference; training-mode RNG
    # dropout is not applied here.

    out = jnp.dot(p.astype(jnp.bfloat16), v.astype(jnp.bfloat16),
                  preferred_element_type=jnp.float32)          # (T, H)
    o_ref[...] = out.astype(o_ref.dtype)

    # TODO(synk): for contexts beyond block_size=256 this dense (T,T) scores
    # path should become a KV-tiled flash-style online softmax with causal
    # block skipping; unnecessary at T <= 256.


def head_forward(x, wk, wq, wv):
    B, T, C = x.shape
    H = wk.shape[1]
    scale = H ** (-0.5)

    # One-time weight prep (would be hoisted to param-conversion in a model):
    # fuse Wk|Wq|Wv into a lane-dense (C, 3H) bf16 weight and fold the
    # 1/sqrt(H) score scale into the query projection.
    wkqv = jnp.concatenate([wk, wq * scale, wv], axis=1).astype(jnp.bfloat16)
    x_bf = x.astype(jnp.bfloat16)       # halves HBM->VMEM traffic for x

    return pl.pallas_call(
        head_kernel,
        out_shape=jax.ShapeDtypeStruct((B, T, H), x.dtype),
        grid_spec=pltpu.PrefetchScalarGridSpec(
            num_scalar_prefetch=0,
            grid=(B,),
            in_specs=[
                pl.BlockSpec((None, T, C), lambda b: (b, 0, 0)),  # x per batch, squeezed
                pl.BlockSpec((C, 3 * H), lambda b: (0, 0)),       # fused Wkqv (whole)
            ],
            out_specs=pl.BlockSpec((None, T, H), lambda b: (b, 0, 0)),
        ),
        compiler_params=pltpu.CompilerParams(
            dimension_semantics=("parallel",)),
    )(x_bf, wkqv)


def reference_forward(x, wk, wq, wv):
    """Pure-JAX f32 reference matching the PyTorch forward (eval mode)."""
    k = x @ wk
    q = x @ wq
    v = x @ wv
    wei = (q @ jnp.swapaxes(k, -2, -1)) * (k.shape[-1] ** -0.5)
    T = x.shape[1]
    tril = jnp.tril(jnp.ones((T, T), dtype=bool))
    wei = jnp.where(tril, wei, -jnp.inf)
    wei = jax.nn.softmax(wei, axis=-1)
    return wei @ v


if __name__ == "__main__":
    key = jax.random.PRNGKey(0)
    k_x, k_wk, k_wq, k_wv = jax.random.split(key, 4)

    B, T, C = 2, 128, n_embd          # T <= block_size
    head_size = 64

    # Deterministic init, mimicking nn.Linear's uniform(-1/sqrt(C), 1/sqrt(C)).
    bound = 1.0 / (C ** 0.5)
    x = jax.random.normal(k_x, (B, T, C), dtype=jnp.float32)
    wk = jax.random.uniform(k_wk, (C, head_size), jnp.float32, -bound, bound)
    wq = jax.random.uniform(k_wq, (C, head_size), jnp.float32, -bound, bound)
    wv = jax.random.uniform(k_wv, (C, head_size), jnp.float32, -bound, bound)

    out = head_forward(x, wk, wq, wv)
    out = jax.block_until_ready(out)

    ref = reference_forward(x, wk, wq, wv)
    assert out.shape == (B, T, head_size)
    # Tolerance loosened for bf16 MXU operands + approx reciprocal.
    assert jnp.allclose(out, ref, atol=2e-2, rtol=2e-2), "mismatch vs reference"

    print("KERNEL_OK")
</pallas_src>

<mosaic_0001>
module attributes {stable_mosaic.version = 11 : i64} {
  func.func @head_kernel(%arg0: i32, %arg1: memref<1x128x384xbf16, #tpu.memory_space<vmem>>, %arg2: memref<384x192xbf16, #tpu.memory_space<vmem>>, %arg3: memref<1x128x64xf32, #tpu.memory_space<vmem>>) attributes {dimension_semantics = [#tpu.dimension_semantics<parallel>], iteration_bounds = array<i64: 2>, scalar_prefetch = 0 : i64, scratch_operands = 0 : i64, tpu.core_type = #tpu.core_type<tc>, window_params = [{transform_indices = @transform_0, window_bounds = array<i64: 1, 128, 384>}, {pipeline_mode = #tpu.pipeline_mode<synchronous>, transform_indices = @transform_1, window_bounds = array<i64: 384, 192>}, {transform_indices = @transform_2, window_bounds = array<i64: 1, 128, 64>}]} {
    %c0 = arith.constant 0 : index
    %c0_0 = arith.constant 0 : index
    %c0_1 = arith.constant 0 : index
    %0 = vector.load %arg1[%c0, %c0_0, %c0_1] : memref<1x128x384xbf16, #tpu.memory_space<vmem>>, vector<1x128x384xbf16>
    %1 = vector.shape_cast %0 : vector<1x128x384xbf16> to vector<128x384xbf16>
    %c0_2 = arith.constant 0 : index
    %c0_3 = arith.constant 0 : index
    %2 = vector.load %arg2[%c0_2, %c0_3] : memref<384x192xbf16, #tpu.memory_space<vmem>>, vector<384x192xbf16>
    %cst = arith.constant dense<0.000000e+00> : vector<128x192xf32>
    %3 = tpu.matmul %1, %2, %cst {dimension_numbers = #tpu.dot_dimension_numbers<[1], [0], [0], [1], [0, 0, 1, 1], [], []>} : vector<128x384xbf16>, vector<384x192xbf16>, vector<128x192xf32> -> vector<128x192xf32>
    %4 = vector.extract_strided_slice %3 {offsets = [0, 0], sizes = [128, 64], strides = [1, 1]} : vector<128x192xf32> to vector<128x64xf32>
    %5 = vector.extract_strided_slice %3 {offsets = [0, 64], sizes = [128, 64], strides = [1, 1]} : vector<128x192xf32> to vector<128x64xf32>
    %6 = vector.extract_strided_slice %3 {offsets = [0, 128], sizes = [128, 64], strides = [1, 1]} : vector<128x192xf32> to vector<128x64xf32>
    %7 = arith.truncf %5 : vector<128x64xf32> to vector<128x64xbf16>
    %8 = arith.truncf %4 : vector<128x64xf32> to vector<128x64xbf16>
    %cst_4 = arith.constant dense<0.000000e+00> : vector<128x128xf32>
    %9 = tpu.matmul %7, %8, %cst_4 {dimension_numbers = #tpu.dot_dimension_numbers<[1], [1], [0], [0], [0, 0, 1, 0], [], []>} : vector<128x64xbf16>, vector<128x64xbf16>, vector<128x128xf32> -> vector<128x128xf32>
    %10 = tpu.iota {dimensions = array<i32: 0>} : vector<128x128xi32>
    %11 = tpu.iota {dimensions = array<i32: 1>} : vector<128x128xi32>
    %12 = arith.cmpi sle, %11, %10 : vector<128x128xi32>
    %cst_5 = arith.constant -1.000000e+30 : f32
    %13 = vector.broadcast %cst_5 : f32 to vector<128x128xf32>
    %14 = arith.select %12, %9, %13 : vector<128x128xi1>, vector<128x128xf32>
    %cst_6 = arith.constant dense<0xFF800000> : vector<128xf32>
    %15 = vector.multi_reduction <maximumf>, %14, %cst_6 [1] : vector<128x128xf32> to vector<128xf32>
    %16 = vector.shape_cast %15 : vector<128xf32> to vector<128x1xf32>
    %17 = vector.broadcast %16 : vector<128x1xf32> to vector<128x128xf32>
    %18 = arith.subf %14, %17 : vector<128x128xf32>
    %19 = math.exp %18 : vector<128x128xf32>
    %cst_7 = arith.constant dense<0.000000e+00> : vector<128xf32>
    %20 = vector.multi_reduction <add>, %19, %cst_7 [1] : vector<128x128xf32> to vector<128xf32>
    %21 = vector.shape_cast %20 : vector<128xf32> to vector<128x1xf32>
    %22 = tpu.reciprocal %21 {approx = true} : vector<128x1xf32> -> vector<128x1xf32>
    %23 = vector.broadcast %22 : vector<128x1xf32> to vector<128x128xf32>
    %24 = arith.mulf %19, %23 : vector<128x128xf32>
    %25 = arith.truncf %24 : vector<128x128xf32> to vector<128x128xbf16>
    %26 = arith.truncf %6 : vector<128x64xf32> to vector<128x64xbf16>
    %cst_8 = arith.constant dense<0.000000e+00> : vector<128x64xf32>
    %27 = tpu.matmul %25, %26, %cst_8 {dimension_numbers = #tpu.dot_dimension_numbers<[1], [0], [0], [1], [0, 0, 1, 1], [], []>} : vector<128x128xbf16>, vector<128x64xbf16>, vector<128x64xf32> -> vector<128x64xf32>
    %c0_9 = arith.constant 0 : index
    %c0_10 = arith.constant 0 : index
    %c0_11 = arith.constant 0 : index
    %28 = vector.load %arg3[%c0_9, %c0_10, %c0_11] : memref<1x128x64xf32, #tpu.memory_space<vmem>>, vector<1x128x64xf32>
    %29 = vector.shape_cast %28 : vector<1x128x64xf32> to vector<128x64xf32>
    %30 = vector.shape_cast %27 : vector<128x64xf32> to vector<1x128x64xf32>
    tpu.vector_store %arg3[%c0_9, %c0_10, %c0_11], %30 {strides = array<i32>} : memref<1x128x64xf32, #tpu.memory_space<vmem>>, vector<1x128x64xf32>,
    return
  }
  func.func @transform_0(%arg0: i32) -> (i32, i32, i32) {
    %c0_i32 = arith.constant 0 : i32
    %c0_i32_0 = arith.constant 0 : i32
    %c0_i32_1 = arith.constant 0 : i32
    return %arg0, %c0_i32, %c0_i32_0 : i32, i32, i32
  }
  func.func @transform_1(%arg0: i32) -> (i32, i32) {
    %c0_i32 = arith.constant 0 : i32
    %c0_i32_0 = arith.constant 0 : i32
    %c0_i32_1 = arith.constant 0 : i32
    return %c0_i32, %c0_i32_0 : i32, i32
  }
  func.func @transform_2(%arg0: i32) -> (i32, i32, i32) {
    %c0_i32 = arith.constant 0 : i32
    %c0_i32_0 = arith.constant 0 : i32
    %c0_i32_1 = arith.constant 0 : i32
    return %arg0, %c0_i32, %c0_i32_0 : i32, i32, i32
  }
}

</mosaic_0001>

<llo_original>
// kernel: tpu_custom_call.1
$region0: #{tpu_custom_call.1}
  #allocation0 [shape = 'u32[]', space=smem, size = 0x4, offset = 0x4, fixed_abs, tag = 'smem constant byte address 0x4 - core index']
  #allocation1 [shape = 'u32[72,128]{1,0:T(1,128)}', space=vmem, size = 0x9000, scoped, tag = 'internal scratch']
  %s0 = inlined_call_operand.vmem [shape: bf16[2,128,384], index: 0, kind: input, shape index: {}]
  %s1 = inlined_call_operand.vmem [shape: bf16[384,192], index: 1, kind: input, shape index: {}]
  %s2 = inlined_call_operand.vmem [shape: f32[2,128,64], index: 2, kind: output, shape index: {}]
  %s3 = sld [smem:[#allocation0]]
  $region41: #{tpu_custom_call.1} parent=0
    _
  %s5 = ssub.s32 1, %s3
  %s6 = scalar_select 0, %s5, %s3
  loop: start=0, step=1, limit=4
  $region2: #{tpu_custom_call.1} parent=0 // loop_pre_header
    _
  $region3: #{tpu_custom_call.1} parent=0 // loop_header
    %s8 = sphi 0, %s12
    %p9 = scmp.ge.s32.totalorder %s8, 4
    %s18 = sphi 0, %s20
    %s21 = sphi 0, %s18
    %s22 = sphi 0, %s21
    %s38 = sphi 0, %s22
    %s42 = sphi 0, %s42
    %s44 = sphi 0, %s42
    %s45 = sphi 0, %s44
    %s59 = sphi 0, %s45
    %s65 = sphi 0, %s67
    %s68 = sphi 0, %s65
    %s69 = sphi 0, %s68
    %s85 = sphi 0, %s69
  $region4: #{tpu_custom_call.1} parent=0 // loop_header_branch
    %11 = sbr.rel (%p9) target = $region8
  $region5: #{tpu_custom_call.1} parent=0 // loop_body
    %s13 = ssub.s32 %s8, 1
    %s14 = ssub.s32 %s8, 2
    %s15 = sadd.s32 %s8, 1
    %s16 = ssub.s32 %s8, %s15
    %p17 = scmp.eq.s32.totalorder %s16, 0
    %s19 = sadd.s32 %s18, 1
    %s20 = scalar_select %p17, %s18, %s19
    %p23 = pneg %p17
    %p24 = scmp.eq.s32.totalorder %s8, 1
    %p25 = por %p23, %p24
    %p26 = scmp.ne.s32.totalorder %s18, %s21
    %p27 = scmp.eq.s32.totalorder %s8, 0
    %p28 = por %p26, %p27
    %p29 = scmp.ne.s32.totalorder %s18, %s21
    %p30 = scmp.eq.s32.totalorder %s13, 1
    %p31 = por %p29, %p30
    %p32 = scmp.ne.s32.totalorder %s21, %s22
    %p33 = scmp.eq.s32.totalorder %s13, 0
    %p34 = por %p32, %p33
    %p35 = scmp.ne.s32.totalorder %s21, %s22
    %p36 = scmp.eq.s32.totalorder %s14, 1
    %p37 = por %p35, %p36
    %p39 = scmp.ne.s32.totalorder %s22, %s38
    %p40 = scmp.eq.s32.totalorder %s14, 0
    %p41 = por %p39, %p40
    %s43 = sadd.s32 %s42, 1
    %p46 = scmp.eq.s32.totalorder %s8, 1
    %p47 = scmp.ne.s32.totalorder %s42, %s44
    %p48 = scmp.eq.s32.totalorder %s8, 0
    %p49 = por %p47, %p48
    %p50 = scmp.ne.s32.totalorder %s42, %s44
    %p51 = scmp.eq.s32.totalorder %s13, 1
    %p52 = por %p50, %p51
    %p53 = scmp.ne.s32.totalorder %s44, %s45
    %p54 = scmp.eq.s32.totalorder %s13, 0
    %p55 = por %p53, %p54
    %p56 = scmp.ne.s32.totalorder %s44, %s45
    %p57 = scmp.eq.s32.totalorder %s14, 1
    %p58 = por %p56, %p57
    %p60 = scmp.ne.s32.totalorder %s45, %s59
    %p61 = scmp.eq.s32.totalorder %s14, 0
    %p62 = por %p60, %p61
    %s63 = ssub.s32 %s8, %s15
    %p64 = scmp.eq.s32.totalorder %s63, 0
    %s66 = sadd.s32 %s65, 1
    %s67 = scalar_select %p64, %s65, %s66
    %p70 = pneg %p64
    %p71 = scmp.eq.s32.totalorder %s8, 1
    %p72 = por %p70, %p71
    %p73 = scmp.ne.s32.totalorder %s65, %s68
    %p74 = scmp.eq.s32.totalorder %s8, 0
    %p75 = por %p73, %p74
    %p76 = scmp.ne.s32.totalorder %s65, %s68
    %p77 = scmp.eq.s32.totalorder %s13, 1
    %p78 = por %p76, %p77
    %p79 = scmp.ne.s32.totalorder %s68, %s69
    %p80 = scmp.eq.s32.totalorder %s13, 0
    %p81 = por %p79, %p80
    %p82 = scmp.ne.s32.totalorder %s68, %s69
    %p83 = scmp.eq.s32.totalorder %s14, 1
    %p84 = por %p82, %p83
    %p86 = scmp.ne.s32.totalorder %s69, %s85
    %p87 = scmp.eq.s32.totalorder %s14, 0
    %p88 = por %p86, %p87
    %p89 = scmp.le.s32.totalorder 1, %s8
    %p90 = scmp.lt.s32.totalorder %s8, 3
    %p91 = pnand %p89, %p90
    %p92 = pneg %p91
    // Predicated region
    $region9: #{tpu_custom_call.1} parent=5 // pred_check
      _
    $region10: #{tpu_custom_call.1} parent=5 // pred_check_branch
      %94 = sbr.rel (%p91) target = $region12
    $region11: #{tpu_custom_call.1} parent=5 // pred_region
      %s95 = ssub.s32 %s8, 1
      // Predicated region
      $region13: #{tpu_custom_call.1} parent=11 // pred_check
        %p96 = pneg %p55
      $region14: #{tpu_custom_call.1} parent=11 // pred_check_branch
        %98 = sbr.rel (%p96) target = $region16
      $region15: #{tpu_custom_call.1} parent=11 // pred_region
        _
      $region16: #{tpu_custom_call.1} parent=11 // pred_fallthru
        _
    $region12: #{tpu_custom_call.1} parent=5 // pred_fallthru
      _
    %p99 = scmp.lt.s32.totalorder %s8, 2
    // Predicated region
    $region17: #{tpu_custom_call.1} parent=5 // pred_check
      %p100 = pneg %p99
    $region18: #{tpu_custom_call.1} parent=5 // pred_check_branch
      %102 = sbr.rel (%p100) target = $region20
    $region19: #{tpu_custom_call.1} parent=5 // pred_region
      // Predicated region
      $region21: #{tpu_custom_call.1} parent=19 // pred_check
        %p103 = pneg %p28
      $region22: #{tpu_custom_call.1} parent=19 // pred_check_branch
        %105 = sbr.rel (%p103) target = $region24
      $region23: #{tpu_custom_call.1} parent=19 // pred_region
        %p106 = scmp.lt.s32.totalorder %s8, 1
        %s107 = scalar_select %p106, %s8, 1
        %s108 = smul.addr %s107, 48
        %s109 = smul.addr %s108, 4
        %s110 = scalar_lea.vmem %s0, %s109
      $region24: #{tpu_custom_call.1} parent=19 // pred_fallthru
        _
    $region20: #{tpu_custom_call.1} parent=5 // pred_fallthru
      _
    %p111 = scmp.le.s32.totalorder 1, %s8
    %p112 = scmp.lt.s32.totalorder %s8, 3
    %p113 = pnand %p111, %p112
    %p114 = pneg %p113
    // Predicated region
    $region25: #{tpu_custom_call.1} parent=5 // pred_check
      _
    $region26: #{tpu_custom_call.1} parent=5 // pred_check_branch
      %116 = sbr.rel (%p113) target = $region28
    $region27: #{tpu_custom_call.1} parent=5 // pred_region
      %s117 = ssub.s32 %s8, 1
      %p118 = scmp.lt.s32.totalorder %s13, 1
      %s119 = scalar_select %p118, %s13, 1
      %s120 = smul.addr %s119, 48
      %s121 = smul.addr %s120, 4
      %s122 = scalar_lea.vmem %s0, %s121
      %p123 = pneg %p34
      %p124 = pneg %p31
      %p125 = pneg %p55
      %p126 = pneg %p52
      %p127 = pneg %p81
      %p128 = pneg %p78
      %p129 = scmp.lt.s32.totalorder %s13, 1
      %s130 = scalar_select %p129, %s13, 1
      %s131 = smul.addr %s130, 16
      %s132 = smul.addr %s131, 8
      %s133 = scalar_lea.vmem %s2, %s132
      %p134 = scmp.lt.s32.totalorder %s13, 1
      %s135 = scalar_select %p134, %s13, 1
      %s136 = smul.addr %s135, 48
      %s137 = smul.addr %s136, 4
      %s138 = scalar_lea.vmem %s0, %s137
      %p139 = scmp.lt.s32.totalorder %s13, 1
      %s140 = scalar_select %p139, %s13, 1
      %s141 = smul.addr %s140, 16
      %s142 = smul.addr %s141, 8
      %s143 = scalar_lea.vmem %s2, %s142
      %v144 = vld [vmem:[%s138] sm:$0xff]
      %v145 = vld [vmem:[%s138 + $0x8] sm:$0xf]
      %v146 = vld [vmem:[%s138 + $0xc] sm:$0xff]
      %v147 = vld [vmem:[%s138 + $0x14] sm:$0xf]
      %v148 = vld [vmem:[%s138 + $0x18] sm:$0xff]
      %v149 = vld [vmem:[%s138 + $0x20] sm:$0xf]
      %v150 = vld [vmem:[%s138 + $0x24] sm:$0xff]
      %v151 = vld [vmem:[%s138 + $0x2c] sm:$0xf]
      %v152 = vld [vmem:[%s138 + $0x30] sm:$0xff]
      %v153 = vld [vmem:[%s138 + $0x38] sm:$0xf]
      %v154 = vld [vmem:[%s138 + $0x3c] sm:$0xff]
      %v155 = vld [vmem:[%s138 + $0x44] sm:$0xf]
      %v156 = vld [vmem:[%s138 + $0x48] sm:$0xff]
      %v157 = vld [vmem:[%s138 + $0x50] sm:$0xf]
      %v158 = vld [vmem:[%s138 + $0x54] sm:$0xff]
      %v159 = vld [vmem:[%s138 + $0x5c] sm:$0xf]
      %v160 = vld [vmem:[%s138 + $0x60] sm:$0xff]
      %v161 = vld [vmem:[%s138 + $0x68] sm:$0xf]
      %v162 = vld [vmem:[%s138 + $0x6c] sm:$0xff]
      %v163 = vld [vmem:[%s138 + $0x74] sm:$0xf]
      %v164 = vld [vmem:[%s138 + $0x78] sm:$0xff]
      %v165 = vld [vmem:[%s138 + $0x80] sm:$0xf]
      %v166 = vld [vmem:[%s138 + $0x84] sm:$0xff]
      %v167 = vld [vmem:[%s138 + $0x8c] sm:$0xf]
      %v168 = vld [vmem:[%s138 + $0x90] sm:$0xff]
      %v169 = vld [vmem:[%s138 + $0x98] sm:$0xf]
      %v170 = vld [vmem:[%s138 + $0x9c] sm:$0xff]
      %v171 = vld [vmem:[%s138 + $0xa4] sm:$0xf]
      %v172 = vld [vmem:[%s138 + $0xa8] sm:$0xff]
      %v173 = vld [vmem:[%s138 + $0xb0] sm:$0xf]
      %v174 = vld [vmem:[%s138 + $0xb4] sm:$0xff]
      %v175 = vld [vmem:[%s138 + $0xbc] sm:$0xf]
      %v176 = vld [vmem:[%s1] sm:$0xff]
      %v177 = vld [vmem:[%s1 + $0x8] sm:$0xff]
      %v178 = vld [vmem:[%s1 + $0x10] sm:$0xff]
      %v179 = vld [vmem:[%s1 + $0x18] sm:$0xff]
      %v180 = vld [vmem:[%s1 + $0x20] sm:$0xff]
      %v181 = vld [vmem:[%s1 + $0x28] sm:$0xff]
      %v182 = vld [vmem:[%s1 + $0x30] sm:$0xff]
      %v183 = vld [vmem:[%s1 + $0x38] sm:$0xff]
      %v184 = vld [vmem:[%s1 + $0x40] sm:$0xff]
      %v185 = vld [vmem:[%s1 + $0x48] sm:$0xff]
      %v186 = vld [vmem:[%s1 + $0x50] sm:$0xff]
      %v187 = vld [vmem:[%s1 + $0x58] sm:$0xff]
      %v188 = vld [vmem:[%s1 + $0x60] sm:$0xff]
      %v189 = vld [vmem:[%s1 + $0x68] sm:$0xff]
      %v190 = vld [vmem:[%s1 + $0x70] sm:$0xff]
      %v191 = vld [vmem:[%s1 + $0x78] sm:$0xff]
      %v192 = vld [vmem:[%s1 + $0x80] sm:$0xff]
      %v193 = vld [vmem:[%s1 + $0x88] sm:$0xff]
      %v194 = vld [vmem:[%s1 + $0x90] sm:$0xff]
      %v195 = vld [vmem:[%s1 + $0x98] sm:$0xff]
      %v196 = vld [vmem:[%s1 + $0xa0] sm:$0xff]
      %v197 = vld [vmem:[%s1 + $0xa8] sm:$0xff]
      %v198 = vld [vmem:[%s1 + $0xb0] sm:$0xff]
      %v199 = vld [vmem:[%s1 + $0xb8] sm:$0xff]
      %v200 = vld [vmem:[%s1 + $0xc0] sm:$0xff]
      %v201 = vld [vmem:[%s1 + $0xc8] sm:$0xff]
      %v202 = vld [vmem:[%s1 + $0xd0] sm:$0xff]
      %v203 = vld [vmem:[%s1 + $0xd8] sm:$0xff]
      %v204 = vld [vmem:[%s1 + $0xe0] sm:$0xff]
      %v205 = vld [vmem:[%s1 + $0xe8] sm:$0xff]
      %v206 = vld [vmem:[%s1 + $0xf0] sm:$0xff]
      %v207 = vld [vmem:[%s1 + $0xf8] sm:$0xff]
      %v208 = vld [vmem:[%s1 + $0x100] sm:$0xff]
      %v209 = vld [vmem:[%s1 + $0x108] sm:$0xff]
      %v210 = vld [vmem:[%s1 + $0x110] sm:$0xff]
      %v211 = vld [vmem:[%s1 + $0x118] sm:$0xff]
      %v212 = vld [vmem:[%s1 + $0x120] sm:$0xff]
      %v213 = vld [vmem:[%s1 + $0x128] sm:$0xff]
      %v214 = vld [vmem:[%s1 + $0x130] sm:$0xff]
      %v215 = vld [vmem:[%s1 + $0x138] sm:$0xff]
      %v216 = vld [vmem:[%s1 + $0x140] sm:$0xff]
      %v217 = vld [vmem:[%s1 + $0x148] sm:$0xff]
      %v218 = vld [vmem:[%s1 + $0x150] sm:$0xff]
      %v219 = vld [vmem:[%s1 + $0x158] sm:$0xff]
      %v220 = vld [vmem:[%s1 + $0x160] sm:$0xff]
      %v221 = vld [vmem:[%s1 + $0x168] sm:$0xff]
      %v222 = vld [vmem:[%s1 + $0x170] sm:$0xff]
      %v223 = vld [vmem:[%s1 + $0x178] sm:$0xff]
      %v256 = vunpack.c.l.b16 %v144
      %v257 = vunpack.c.h.b16 %v144
      %v258 = vunpack.c.l.b16 %v145
      %v259 = vunpack.c.l.b16 %v146
      %v260 = vunpack.c.h.b16 %v146
      %v261 = vunpack.c.l.b16 %v147
      %v262 = vunpack.c.l.b16 %v148
      %v263 = vunpack.c.h.b16 %v148
      %v264 = vunpack.c.l.b16 %v149
      %v265 = vunpack.c.l.b16 %v150
      %v266 = vunpack.c.h.b16 %v150
      %v267 = vunpack.c.l.b16 %v151
      %v268 = vunpack.c.l.b16 %v152
      %v269 = vunpack.c.h.b16 %v152
      %v270 = vunpack.c.l.b16 %v153
      %v271 = vunpack.c.l.b16 %v154
      %v272 = vunpack.c.h.b16 %v154
      %v273 = vunpack.c.l.b16 %v155
      %v274 = vunpack.c.l.b16 %v156
      %v275 = vunpack.c.h.b16 %v156
      %v276 = vunpack.c.l.b16 %v157
      %v277 = vunpack.c.l.b16 %v158
      %v278 = vunpack.c.h.b16 %v158
      %v279 = vunpack.c.l.b16 %v159
      %v280 = vunpack.c.l.b16 %v160
      %v281 = vunpack.c.h.b16 %v160
      %v282 = vunpack.c.l.b16 %v161
      %v283 = vunpack.c.l.b16 %v162
      %v284 = vunpack.c.h.b16 %v162
      %v285 = vunpack.c.l.b16 %v163
      %v286 = vunpack.c.l.b16 %v164
      %v287 = vunpack.c.h.b16 %v164
      %v288 = vunpack.c.l.b16 %v165
      %v289 = vunpack.c.l.b16 %v166
      %v290 = vunpack.c.h.b16 %v166
      %v291 = vunpack.c.l.b16 %v167
      %v292 = vunpack.c.l.b16 %v168
      %v293 = vunpack.c.h.b16 %v168
      %v294 = vunpack.c.l.b16 %v169
      %v295 = vunpack.c.l.b16 %v170
      %v296 = vunpack.c.h.b16 %v170
      %v297 = vunpack.c.l.b16 %v171
      %v298 = vunpack.c.l.b16 %v172
      %v299 = vunpack.c.h.b16 %v172
      %v300 = vunpack.c.l.b16 %v173
      %v301 = vunpack.c.l.b16 %v174
      %v302 = vunpack.c.h.b16 %v174
      %v303 = vunpack.c.l.b16 %v175
      %v304 = vpack.c.b16 %v259, %v256
      %v305 = vpack.c.b16 %v260, %v257
      %v306 = vpack.c.b16 %v261, %v258
      %v307 = vpack.c.b16 %v265, %v262
      %v308 = vpack.c.b16 %v266, %v263
      %v309 = vpack.c.b16 %v267, %v264
      %v310 = vpack.c.b16 %v271, %v268
      %v311 = vpack.c.b16 %v272, %v269
      %v312 = vpack.c.b16 %v273, %v270
      %v313 = vpack.c.b16 %v277, %v274
      %v314 = vpack.c.b16 %v278, %v275
      %v315 = vpack.c.b16 %v279, %v276
      %v316 = vpack.c.b16 %v283, %v280
      %v317 = vpack.c.b16 %v284, %v281
      %v318 = vpack.c.b16 %v285, %v282
      %v319 = vpack.c.b16 %v289, %v286
      %v320 = vpack.c.b16 %v290, %v287
      %v321 = vpack.c.b16 %v291, %v288
      %v322 = vpack.c.b16 %v295, %v292
      %v323 = vpack.c.b16 %v296, %v293
      %v324 = vpack.c.b16 %v297, %v294
      %v325 = vpack.c.b16 %v301, %v298
      %v326 = vpack.c.b16 %v302, %v299
      %v327 = vpack.c.b16 %v303, %v300
      %v400 = vunpack.c.l.b16 %v176
      %v401 = vunpack.c.h.b16 %v176
      %v402 = vunpack.c.l.b16 %v177
      %v403 = vunpack.c.h.b16 %v177
      %v404 = vunpack.c.l.b16 %v178
      %v405 = vunpack.c.h.b16 %v178
      %v406 = vunpack.c.l.b16 %v179
      %v407 = vunpack.c.h.b16 %v179
      %v408 = vunpack.c.l.b16 %v180
      %v409 = vunpack.c.h.b16 %v180
      %v410 = vunpack.c.l.b16 %v181
      %v411 = vunpack.c.h.b16 %v181
      %v412 = vunpack.c.l.b16 %v182
      %v413 = vunpack.c.h.b16 %v182
      %v414 = vunpack.c.l.b16 %v183
      %v415 = vunpack.c.h.b16 %v183
      %v416 = vunpack.c.l.b16 %v184
      %v417 = vunpack.c.h.b16 %v184
      %v418 = vunpack.c.l.b16 %v185
      %v419 = vunpack.c.h.b16 %v185
      %v420 = vunpack.c.l.b16 %v186
      %v421 = vunpack.c.h.b16 %v186
      %v422 = vunpack.c.l.b16 %v187
      %v423 = vunpack.c.h.b16 %v187
      %v424 = vunpack.c.l.b16 %v188
      %v425 = vunpack.c.h.b16 %v188
      %v426 = vunpack.c.l.b16 %v189
      %v427 = vunpack.c.h.b16 %v189
      %v428 = vunpack.c.l.b16 %v190
      %v429 = vunpack.c.h.b16 %v190
      %v430 = vunpack.c.l.b16 %v191
      %v431 = vunpack.c.h.b16 %v191
      %v432 = vunpack.c.l.b16 %v192
      %v433 = vunpack.c.h.b16 %v192
      %v434 = vunpack.c.l.b16 %v193
      %v435 = vunpack.c.h.b16 %v193
      %v436 = vunpack.c.l.b16 %v194
      %v437 = vunpack.c.h.b16 %v194
      %v438 = vunpack.c.l.b16 %v195
      %v439 = vunpack.c.h.b16 %v195
      %v440 = vunpack.c.l.b16 %v196
      %v441 = vunpack.c.h.b16 %v196
      %v442 = vunpack.c.l.b16 %v197
      %v443 = vunpack.c.h.b16 %v197
      %v444 = vunpack.c.l.b16 %v198
      %v445 = vunpack.c.h.b16 %v198
      %v446 = vunpack.c.l.b16 %v199
      %v447 = vunpack.c.h.b16 %v199
      %v448 = vunpack.c.l.b16 %v200
      %v449 = vunpack.c.h.b16 %v200
      %v450 = vunpack.c.l.b16 %v201
      %v451 = vunpack.c.h.b16 %v201
      %v452 = vunpack.c.l.b16 %v202
      %v453 = vunpack.c.h.b16 %v202
      %v454 = vunpack.c.l.b16 %v203
      %v455 = vunpack.c.h.b16 %v203
      %v456 = vunpack.c.l.b16 %v204
      %v457 = vunpack.c.h.b16 %v204
      %v458 = vunpack.c.l.b16 %v205
      %v459 = vunpack.c.h.b16 %v205
      %v460 = vunpack.c.l.b16 %v206
      %v461 = vunpack.c.h.b16 %v206
      %v462 = vunpack.c.l.b16 %v207
      %v463 = vunpack.c.h.b16 %v207
      %v464 = vunpack.c.l.b16 %v208
      %v465 = vunpack.c.h.b16 %v208
      %v466 = vunpack.c.l.b16 %v209
      %v467 = vunpack.c.h.b16 %v209
      %v468 = vunpack.c.l.b16 %v210
      %v469 = vunpack.c.h.b16 %v210
      %v470 = vunpack.c.l.b16 %v211
      %v471 = vunpack.c.h.b16 %v211
      %v472 = vunpack.c.l.b16 %v212
      %v473 = vunpack.c.h.b16 %v212
      %v474 = vunpack.c.l.b16 %v213
      %v475 = vunpack.c.h.b16 %v213
      %v476 = vunpack.c.l.b16 %v214
      %v477 = vunpack.c.h.b16 %v214
      %v478 = vunpack.c.l.b16 %v215
      %v479 = vunpack.c.h.b16 %v215
      %v480 = vunpack.c.l.b16 %v216
      %v481 = vunpack.c.h.b16 %v216
      %v482 = vunpack.c.l.b16 %v217
      %v483 = vunpack.c.h.b16 %v217
      %v484 = vunpack.c.l.b16 %v218
      %v485 = vunpack.c.h.b16 %v218
      %v486 = vunpack.c.l.b16 %v219
      %v487 = vunpack.c.h.b16 %v219
      %v488 = vunpack.c.l.b16 %v220
      %v489 = vunpack.c.h.b16 %v220
      %v490 = vunpack.c.l.b16 %v221
      %v491 = vunpack.c.h.b16 %v221
      %v492 = vunpack.c.l.b16 %v222
      %v493 = vunpack.c.h.b16 %v222
      %v494 = vunpack.c.l.b16 %v223
      %v495 = vunpack.c.h.b16 %v223
      %v496 = vpack.c.b16 %v402, %v400
      %v497 = vpack.c.b16 %v403, %v401
      %v498 = vpack.c.b16 %v406, %v404
      %v499 = vpack.c.b16 %v407, %v405
      %v500 = vpack.c.b16 %v410, %v408
      %v501 = vpack.c.b16 %v411, %v409
      %v502 = vpack.c.b16 %v414, %v412
      %v503 = vpack.c.b16 %v415, %v413
      %v504 = vpack.c.b16 %v418, %v416
      %v505 = vpack.c.b16 %v419, %v417
      %v506 = vpack.c.b16 %v422, %v420
      %v507 = vpack.c.b16 %v423, %v421
      %v508 = vpack.c.b16 %v426, %v424
      %v509 = vpack.c.b16 %v427, %v425
      %v510 = vpack.c.b16 %v430, %v428
      %v511 = vpack.c.b16 %v431, %v429
      %v512 = vpack.c.b16 %v434, %v432
      %v513 = vpack.c.b16 %v435, %v433
      %v514 = vpack.c.b16 %v438, %v436
      %v515 = vpack.c.b16 %v439, %v437
      %v516 = vpack.c.b16 %v442, %v440
      %v517 = vpack.c.b16 %v443, %v441
      %v518 = vpack.c.b16 %v446, %v444
      %v519 = vpack.c.b16 %v447, %v445
      %v520 = vpack.c.b16 %v450, %v448
      %v521 = vpack.c.b16 %v451, %v449
      %v522 = vpack.c.b16 %v454, %v452
      %v523 = vpack.c.b16 %v455, %v453
      %v524 = vpack.c.b16 %v458, %v456
      %v525 = vpack.c.b16 %v459, %v457
      %v526 = vpack.c.b16 %v462, %v460
      %v527 = vpack.c.b16 %v463, %v461
      %v528 = vpack.c.b16 %v466, %v464
      %v529 = vpack.c.b16 %v467, %v465
      %v530 = vpack.c.b16 %v470, %v468
      %v531 = vpack.c.b16 %v471, %v469
      %v532 = vpack.c.b16 %v474, %v472
      %v533 = vpack.c.b16 %v475, %v473
      %v534 = vpack.c.b16 %v478, %v476
      %v535 = vpack.c.b16 %v479, %v477
      %v536 = vpack.c.b16 %v482, %v480
      %v537 = vpack.c.b16 %v483, %v481
      %v538 = vpack.c.b16 %v486, %v484
      %v539 = vpack.c.b16 %v487, %v485
      %v540 = vpack.c.b16 %v490, %v488
      %v541 = vpack.c.b16 %v491, %v489
      %v542 = vpack.c.b16 %v494, %v492
      %v543 = vpack.c.b16 %v495, %v493
      %592 = vmatpush.bf16.msra.mxu0 %v510
      %593 = vmatpush.bf16.msra.mxu0 %v508
      %594 = vmatpush.bf16.msra.mxu0 %v506
      %595 = vmatpush.bf16.msra.mxu0 %v504
      %596 = vmatpush.bf16.msra.mxu0 %v502
      %597 = vmatpush.bf16.msra.mxu0 %v500
      %598 = vmatpush.bf16.msra.mxu0 %v498
      %599 = vmatpush.bf16.msra.mxu0 %v496
      %600 = vmatmul.bf16.gmra.mxu0 %v304
      %v601 = vpop.f32.mrf.mxu0
      %v602 = vadd.f32 0.0, %v601
      %v603 = vpop.f32.mrf.mxu0
      %v604 = vadd.f32 0.0, %v603
      %605 = vmatmul.bf16.gmra.mxu0 %v307
      %v606 = vpop.f32.mrf.mxu0
      %v607 = vadd.f32 0.0, %v606
      %v608 = vpop.f32.mrf.mxu0
      %v609 = vadd.f32 0.0, %v608
      %610 = vmatmul.bf16.gmra.mxu0 %v310
      %v611 = vpop.f32.mrf.mxu0
      %v612 = vadd.f32 0.0, %v611
      %v613 = vpop.f32.mrf.mxu0
      %v614 = vadd.f32 0.0, %v613
      %615 = vmatmul.bf16.gmra.mxu0 %v313
      %v616 = vpop.f32.mrf.mxu0
      %v617 = vadd.f32 0.0, %v616
      %v618 = vpop.f32.mrf.mxu0
      %v619 = vadd.f32 0.0, %v618
      %620 = vmatmul.bf16.gmra.mxu0 %v316
      %v621 = vpop.f32.mrf.mxu0
      %v622 = vadd.f32 0.0, %v621
      %v623 = vpop.f32.mrf.mxu0
      %v624 = vadd.f32 0.0, %v623
      %625 = vmatmul.bf16.gmra.mxu0 %v319
      %v626 = vpop.f32.mrf.mxu0
      %v627 = vadd.f32 0.0, %v626
      %v628 = vpop.f32.mrf.mxu0
      %v629 = vadd.f32 0.0, %v628
      %630 = vmatmul.bf16.gmra.mxu0 %v322
      %v631 = vpop.f32.mrf.mxu0
      %v632 = vadd.f32 0.0, %v631
      %v633 = vpop.f32.mrf.mxu0
      %v634 = vadd.f32 0.0, %v633
      %635 = vmatmul.bf16.gmra.mxu0 %v325
      %v636 = vpop.f32.mrf.mxu0
      %v637 = vadd.f32 0.0, %v636
      %v638 = vpop.f32.mrf.mxu0
      %v639 = vadd.f32 0.0, %v638
      %640 = vdwg.mxu0
      %641 = vmatpush.bf16.msra.mxu0 %v526
      %642 = vmatpush.bf16.msra.mxu0 %v524
      %643 = vmatpush.bf16.msra.mxu0 %v522
      %644 = vmatpush.bf16.msra.mxu0 %v520
      %645 = vmatpush.bf16.msra.mxu0 %v518
      %646 = vmatpush.bf16.msra.mxu0 %v516
      %647 = vmatpush.bf16.msra.mxu0 %v514
      %648 = vmatpush.bf16.msra.mxu0 %v512
      %649 = vmatmul.bf16.gmra.mxu0 %v305
      %v650 = vpop.f32.mrf.mxu0
      %v651 = vadd.f32 %v602, %v650
      %v652 = vpop.f32.mrf.mxu0
      %v653 = vadd.f32 %v604, %v652
      %654 = vmatmul.bf16.gmra.mxu0 %v308
      %v655 = vpop.f32.mrf.mxu0
      %v656 = vadd.f32 %v607, %v655
      %v657 = vpop.f32.mrf.mxu0
      %v658 = vadd.f32 %v609, %v657
      %659 = vmatmul.bf16.gmra.mxu0 %v311
      %v660 = vpop.f32.mrf.mxu0
      %v661 = vadd.f32 %v612, %v660
      %v662 = vpop.f32.mrf.mxu0
      %v663 = vadd.f32 %v614, %v662
      %664 = vmatmul.bf16.gmra.mxu0 %v314
      %v665 = vpop.f32.mrf.mxu0
      %v666 = vadd.f32 %v617, %v665
      %v667 = vpop.f32.mrf.mxu0
      %v668 = vadd.f32 %v619, %v667
      %669 = vmatmul.bf16.gmra.mxu0 %v317
      %v670 = vpop.f32.mrf.mxu0
      %v671 = vadd.f32 %v622, %v670
      %v672 = vpop.f32.mrf.mxu0
      %v673 = vadd.f32 %v624, %v672
      %674 = vmatmul.bf16.gmra.mxu0 %v320
      %v675 = vpop.f32.mrf.mxu0
      %v676 = vadd.f32 %v627, %v675
      %v677 = vpop.f32.mrf.mxu0
      %v678 = vadd.f32 %v629, %v677
      %679 = vmatmul.bf16.gmra.mxu0 %v323
      %v680 = vpop.f32.mrf.mxu0
      %v681 = vadd.f32 %v632, %v680
      %v682 = vpop.f32.mrf.mxu0
      %v683 = vadd.f32 %v634, %v682
      %684 = vmatmul.bf16.gmra.mxu0 %v326
      %v685 = vpop.f32.mrf.mxu0
      %v686 = vadd.f32 %v637, %v685
      %v687 = vpop.f32.mrf.mxu0
      %v688 = vadd.f32 %v639, %v687
      %689 = vdwg.mxu0
      %690 = vmatpush.bf16.msra.mxu0 %v542
      %691 = vmatpush.bf16.msra.mxu0 %v540
      %692 = vmatpush.bf16.msra.mxu0 %v538
      %693 = vmatpush.bf16.msra.mxu0 %v536
      %694 = vmatpush.bf16.msra.mxu0 %v534
      %695 = vmatpush.bf16.msra.mxu0 %v532
      %696 = vmatpush.bf16.msra.mxu0 %v530
      %697 = vmatpush.bf16.msra.mxu0 %v528
      %698 = vmatmul.bf16.gmra.mxu0 %v306
      %v699 = vpop.f32.mrf.mxu0
      %v700 = vadd.f32 %v651, %v699
      %v701 = vpop.f32.mrf.mxu0
      %v702 = vadd.f32 %v653, %v701
      %703 = vmatmul.bf16.gmra.mxu0 %v309
      %v704 = vpop.f32.mrf.mxu0
      %v705 = vadd.f32 %v656, %v704
      %v706 = vpop.f32.mrf.mxu0
      %v707 = vadd.f32 %v658, %v706
      %708 = vmatmul.bf16.gmra.mxu0 %v312
      %v709 = vpop.f32.mrf.mxu0
      %v710 = vadd.f32 %v661, %v709
      %v711 = vpop.f32.mrf.mxu0
      %v712 = vadd.f32 %v663, %v711
      %713 = vmatmul.bf16.gmra.mxu0 %v315
      %v714 = vpop.f32.mrf.mxu0
      %v715 = vadd.f32 %v666, %v714
      %v716 = vpop.f32.mrf.mxu0
      %v717 = vadd.f32 %v668, %v716
      %718 = vmatmul.bf16.gmra.mxu0 %v318
      %v719 = vpop.f32.mrf.mxu0
      %v720 = vadd.f32 %v671, %v719
      %v721 = vpop.f32.mrf.mxu0
      %v722 = vadd.f32 %v673, %v721
      %723 = vmatmul.bf16.gmra.mxu0 %v321
      %v724 = vpop.f32.mrf.mxu0
      %v725 = vadd.f32 %v676, %v724
      %v726 = vpop.f32.mrf.mxu0
      %v727 = vadd.f32 %v678, %v726
      %728 = vmatmul.bf16.gmra.mxu0 %v324
      %v729 = vpop.f32.mrf.mxu0
      %v730 = vadd.f32 %v681, %v729
      %v731 = vpop.f32.mrf.mxu0
      %v732 = vadd.f32 %v683, %v731
      %733 = vmatmul.bf16.gmra.mxu0 %v327
      %v734 = vpop.f32.mrf.mxu0
      %v735 = vadd.f32 %v686, %v734
      %v736 = vpop.f32.mrf.mxu0
      %v737 = vadd.f32 %v688, %v736
      %738 = vdwg.mxu0
      %739 = vmatpush.bf16.msra.mxu0 %v511
      %740 = vmatpush.bf16.msra.mxu0 %v509
      %741 = vmatpush.bf16.msra.mxu0 %v507
      %742 = vmatpush.bf16.msra.mxu0 %v505
      %743 = vmatpush.bf16.msra.mxu0 %v503
      %744 = vmatpush.bf16.msra.mxu0 %v501
      %745 = vmatpush.bf16.msra.mxu0 %v499
      %746 = vmatpush.bf16.msra.mxu0 %v497
      %747 = vmatmul.bf16.gmra.mxu0 %v304
      %v748 = vpop.f32.mrf.mxu0
      %v749 = vadd.f32 0.0, %v748
      %v750 = vpop.f32.mrf.mxu0
      %v751 = vadd.f32 0.0, %v750
      %752 = vmatmul.bf16.gmra.mxu0 %v307
      %v753 = vpop.f32.mrf.mxu0
      %v754 = vadd.f32 0.0, %v753
      %v755 = vpop.f32.mrf.mxu0
      %v756 = vadd.f32 0.0, %v755
      %757 = vmatmul.bf16.gmra.mxu0 %v310
      %v758 = vpop.f32.mrf.mxu0
      %v759 = vadd.f32 0.0, %v758
      %v760 = vpop.f32.mrf.mxu0
      %v761 = vadd.f32 0.0, %v760
      %762 = vmatmul.bf16.gmra.mxu0 %v313
      %v763 = vpop.f32.mrf.mxu0
      %v764 = vadd.f32 0.0, %v763
      %v765 = vpop.f32.mrf.mxu0
      %v766 = vadd.f32 0.0, %v765
      %767 = vmatmul.bf16.gmra.mxu0 %v316
      %v768 = vpop.f32.mrf.mxu0
      %v769 = vadd.f32 0.0, %v768
      %v770 = vpop.f32.mrf.mxu0
      %v771 = vadd.f32 0.0, %v770
      %772 = vmatmul.bf16.gmra.mxu0 %v319
      %v773 = vpop.f32.mrf.mxu0
      %v774 = vadd.f32 0.0, %v773
      %v775 = vpop.f32.mrf.mxu0
      %v776 = vadd.f32 0.0, %v775
      %777 = vmatmul.bf16.gmra.mxu0 %v322
      %v778 = vpop.f32.mrf.mxu0
      %v779 = vadd.f32 0.0, %v778
      %v780 = vpop.f32.mrf.mxu0
      %v781 = vadd.f32 0.0, %v780
      %782 = vmatmul.bf16.gmra.mxu0 %v325
      %v783 = vpop.f32.mrf.mxu0
      %v784 = vadd.f32 0.0, %v783
      %v785 = vpop.f32.mrf.mxu0
      %v786 = vadd.f32 0.0, %v785
      %787 = vdwg.mxu0
      %788 = vmatpush.bf16.msra.mxu0 %v527
      %789 = vmatpush.bf16.msra.mxu0 %v525
      %790 = vmatpush.bf16.msra.mxu0 %v523
      %791 = vmatpush.bf16.msra.mxu0 %v521
      %792 = vmatpush.bf16.msra.mxu0 %v519
      %793 = vmatpush.bf16.msra.mxu0 %v517
      %794 = vmatpush.bf16.msra.mxu0 %v515
      %795 = vmatpush.bf16.msra.mxu0 %v513
      %796 = vmatmul.bf16.gmra.mxu0 %v305
      %v797 = vpop.f32.mrf.mxu0
      %v798 = vadd.f32 %v749, %v797
      %v799 = vpop.f32.mrf.mxu0
      %v800 = vadd.f32 %v751, %v799
      %801 = vmatmul.bf16.gmra.mxu0 %v308
      %v802 = vpop.f32.mrf.mxu0
      %v803 = vadd.f32 %v754, %v802
      %v804 = vpop.f32.mrf.mxu0
      %v805 = vadd.f32 %v756, %v804
      %806 = vmatmul.bf16.gmra.mxu0 %v311
      %v807 = vpop.f32.mrf.mxu0
      %v808 = vadd.f32 %v759, %v807
      %v809 = vpop.f32.mrf.mxu0
      %v810 = vadd.f32 %v761, %v809
      %811 = vmatmul.bf16.gmra.mxu0 %v314
      %v812 = vpop.f32.mrf.mxu0
      %v813 = vadd.f32 %v764, %v812
      %v814 = vpop.f32.mrf.mxu0
      %v815 = vadd.f32 %v766, %v814
      %816 = vmatmul.bf16.gmra.mxu0 %v317
      %v817 = vpop.f32.mrf.mxu0
      %v818 = vadd.f32 %v769, %v817
      %v819 = vpop.f32.mrf.mxu0
      %v820 = vadd.f32 %v771, %v819
      %821 = vmatmul.bf16.gmra.mxu0 %v320
      %v822 = vpop.f32.mrf.mxu0
      %v823 = vadd.f32 %v774, %v822
      %v824 = vpop.f32.mrf.mxu0
      %v825 = vadd.f32 %v776, %v824
      %826 = vmatmul.bf16.gmra.mxu0 %v323
      %v827 = vpop.f32.mrf.mxu0
      %v828 = vadd.f32 %v779, %v827
      %v829 = vpop.f32.mrf.mxu0
      %v830 = vadd.f32 %v781, %v829
      %831 = vmatmul.bf16.gmra.mxu0 %v326
      %v832 = vpop.f32.mrf.mxu0
      %v833 = vadd.f32 %v784, %v832
      %v834 = vpop.f32.mrf.mxu0
      %v835 = vadd.f32 %v786, %v834
      %836 = vdwg.mxu0
      %837 = vmatpush.bf16.msra.mxu0 %v543
      %838 = vmatpush.bf16.msra.mxu0 %v541
      %839 = vmatpush.bf16.msra.mxu0 %v539
      %840 = vmatpush.bf16.msra.mxu0 %v537
      %841 = vmatpush.bf16.msra.mxu0 %v535
      %842 = vmatpush.bf16.msra.mxu0 %v533
      %843 = vmatpush.bf16.msra.mxu0 %v531
      %844 = vmatpush.bf16.msra.mxu0 %v529
      %845 = vmatmul.bf16.gmra.mxu0 %v306
      %v846 = vpop.f32.mrf.mxu0
      %v847 = vadd.f32 %v798, %v846
      %v848 = vpop.f32.mrf.mxu0
      %v849 = vadd.f32 %v800, %v848
      %850 = vmatmul.bf16.gmra.mxu0 %v309
      %v851 = vpop.f32.mrf.mxu0
      %v852 = vadd.f32 %v803, %v851
      %v853 = vpop.f32.mrf.mxu0
      %v854 = vadd.f32 %v805, %v853
      %855 = vmatmul.bf16.gmra.mxu0 %v312
      %v856 = vpop.f32.mrf.mxu0
      %v857 = vadd.f32 %v808, %v856
      %v858 = vpop.f32.mrf.mxu0
      %v859 = vadd.f32 %v810, %v858
      %860 = vmatmul.bf16.gmra.mxu0 %v315
      %v861 = vpop.f32.mrf.mxu0
      %v862 = vadd.f32 %v813, %v861
      %v863 = vpop.f32.mrf.mxu0
      %v864 = vadd.f32 %v815, %v863
      %865 = vmatmul.bf16.gmra.mxu0 %v318
      %v866 = vpop.f32.mrf.mxu0
      %v867 = vadd.f32 %v818, %v866
      %v868 = vpop.f32.mrf.mxu0
      %v869 = vadd.f32 %v820, %v868
      %870 = vmatmul.bf16.gmra.mxu0 %v321
      %v871 = vpop.f32.mrf.mxu0
      %v872 = vadd.f32 %v823, %v871
      %v873 = vpop.f32.mrf.mxu0
      %v874 = vadd.f32 %v825, %v873
      %875 = vmatmul.bf16.gmra.mxu0 %v324
      %v876 = vpop.f32.mrf.mxu0
      %v877 = vadd.f32 %v828, %v876
      %v878 = vpop.f32.mrf.mxu0
      %v879 = vadd.f32 %v830, %v878
      %880 = vmatmul.bf16.gmra.mxu0 %v327
      %v881 = vpop.f32.mrf.mxu0
      %v882 = vadd.f32 %v833, %v881
      %v883 = vpop.f32.mrf.mxu0
      %v884 = vadd.f32 %v835, %v883
      %885 = vdwg.mxu0
      %v886 = vpack.c.bf16 %v702, %v700
      %v887 = vpack.c.bf16 %v707, %v705
      %v888 = vpack.c.bf16 %v712, %v710
      %v889 = vpack.c.bf16 %v717, %v715
      %v890 = vpack.c.bf16 %v722, %v720
      %v891 = vpack.c.bf16 %v727, %v725
      %v892 = vpack.c.bf16 %v732, %v730
      %v893 = vpack.c.bf16 %v737, %v735
      %902 = vrot.lane.b32.xlu0 %v886, 64
      %v903 = vpop.permute.xlu0 %902
      %904 = vrot.lane.b32.xlu0 %v887, 64
      %v905 = vpop.permute.xlu0 %904
      %906 = vrot.lane.b32.xlu0 %v888, 64
      %v907 = vpop.permute.xlu0 %906
      %908 = vrot.lane.b32.xlu0 %v889, 64
      %v909 = vpop.permute.xlu0 %908
      %910 = vrot.lane.b32.xlu0 %v890, 64
      %v911 = vpop.permute.xlu0 %910
      %912 = vrot.lane.b32.xlu0 %v891, 64
      %v913 = vpop.permute.xlu0 %912
      %914 = vrot.lane.b32.xlu0 %v892, 64
      %v915 = vpop.permute.xlu0 %914
      %916 = vrot.lane.b32.xlu0 %v893, 64
      %v917 = vpop.permute.xlu0 %916
      %vm918 = vcmask 523264
      %v920 = vsel %vm918, %v903, 0
      %v923 = vsel %vm918, %v905, 0
      %v926 = vsel %vm918, %v907, 0
      %v929 = vsel %vm918, %v909, 0
      %v932 = vsel %vm918, %v911, 0
      %v935 = vsel %vm918, %v913, 0
      %v938 = vsel %vm918, %v915, 0
      %v941 = vsel %vm918, %v917, 0
      %v944 = vsel %vm918, %v886, 0
      %v947 = vsel %vm918, %v887, 0
      %v950 = vsel %vm918, %v888, 0
      %v953 = vsel %vm918, %v889, 0
      %v956 = vsel %vm918, %v890, 0
      %v959 = vsel %vm918, %v891, 0
      %v962 = vsel %vm918, %v892, 0
      %v965 = vsel %vm918, %v893, 0
      %967 = vmatpush.bf16.xpose.msra.mxu0 %v965
      %968 = vmatpush.bf16.xpose.msra.mxu0 %v962
      %969 = vmatpush.bf16.xpose.msra.mxu0 %v959
      %970 = vmatpush.bf16.xpose.msra.mxu0 %v956
      %971 = vmatpush.bf16.xpose.msra.mxu0 %v953
      %972 = vmatpush.bf16.xpose.msra.mxu0 %v950
      %973 = vmatpush.bf16.xpose.msra.mxu0 %v947
      %974 = vmatpush.bf16.xpose.msra.mxu0 %v944
      %975 = vmatmul.bf16.gmra.mxu0 %v920
      %v976 = vpop.f32.mrf.mxu0
      %v977 = vadd.f32 0.0, %v976
      %v978 = vpop.f32.mrf.mxu0
      %v979 = vadd.f32 0.0, %v978
      %980 = vmatmul.bf16.gmra.mxu0 %v923
      %v981 = vpop.f32.mrf.mxu0
      %v982 = vadd.f32 0.0, %v981
      %v983 = vpop.f32.mrf.mxu0
      %v984 = vadd.f32 0.0, %v983
      %985 = vmatmul.bf16.gmra.mxu0 %v926
      %v986 = vpop.f32.mrf.mxu0
      %v987 = vadd.f32 0.0, %v986
      %v988 = vpop.f32.mrf.mxu0
      %v989 = vadd.f32 0.0, %v988
      %990 = vmatmul.bf16.gmra.mxu0 %v929
      %v991 = vpop.f32.mrf.mxu0
      %v992 = vadd.f32 0.0, %v991
      %v993 = vpop.f32.mrf.mxu0
      %v994 = vadd.f32 0.0, %v993
      %995 = vmatmul.bf16.gmra.mxu0 %v932
      %v996 = vpop.f32.mrf.mxu0
      %v997 = vadd.f32 0.0, %v996
      %v998 = vpop.f32.mrf.mxu0
      %v999 = vadd.f32 0.0, %v998
      %1000 = vmatmul.bf16.gmra.mxu0 %v935
      %v1001 = vpop.f32.mrf.mxu0
      %v1002 = vadd.f32 0.0, %v1001
      %v1003 = vpop.f32.mrf.mxu0
      %v1004 = vadd.f32 0.0, %v1003
      %1005 = vmatmul.bf16.gmra.mxu0 %v938
      %v1006 = vpop.f32.mrf.mxu0
      %v1007 = vadd.f32 0.0, %v1006
      %v1008 = vpop.f32.mrf.mxu0
      %v1009 = vadd.f32 0.0, %v1008
      %1010 = vmatmul.bf16.gmra.mxu0 %v941
      %v1011 = vpop.f32.mrf.mxu0
      %v1012 = vadd.f32 0.0, %v1011
      %v1013 = vpop.f32.mrf.mxu0
      %v1014 = vadd.f32 0.0, %v1013
      %1015 = vdwg.mxu0
      %v1016 = vlaneseq
      %v1017 = vshrl.u32 %v1016, 7
      %v1018 = vadd.s32 %v1017, 8
      %v1019 = vadd.s32 %v1017, 16
      %v1020 = vadd.s32 %v1017, 24
      %v1021 = vadd.s32 %v1017, 32
      %v1022 = vadd.s32 %v1017, 40
      %v1023 = vadd.s32 %v1017, 48
      %v1024 = vadd.s32 %v1017, 56
      %v1025 = vadd.s32 %v1017, 64
      %v1026 = vadd.s32 %v1017, 72
      %v1027 = vadd.s32 %v1017, 80
      %v1028 = vadd.s32 %v1017, 88
      %v1029 = vadd.s32 %v1017, 96
      %v1030 = vadd.s32 %v1017, 104
      %v1031 = vadd.s32 %v1017, 112
      %v1032 = vadd.s32 %v1017, 120
      %v1033 = vlaneseq
      %v1034 = vand.u32 %v1033, 127
      %vm1035 = vcmp.le.s32.totalorder %v1034, %v1017
      %vm1036 = vcmp.le.s32.totalorder %v1034, %v1018
      %vm1037 = vcmp.le.s32.totalorder %v1034, %v1019
      %vm1038 = vcmp.le.s32.totalorder %v1034, %v1020
      %vm1039 = vcmp.le.s32.totalorder %v1034, %v1021
      %vm1040 = vcmp.le.s32.totalorder %v1034, %v1022
      %vm1041 = vcmp.le.s32.totalorder %v1034, %v1023
      %vm1042 = vcmp.le.s32.totalorder %v1034, %v1024
      %vm1043 = vcmp.le.s32.totalorder %v1034, %v1025
      %vm1044 = vcmp.le.s32.totalorder %v1034, %v1026
      %vm1045 = vcmp.le.s32.totalorder %v1034, %v1027
      %vm1046 = vcmp.le.s32.totalorder %v1034, %v1028
      %vm1047 = vcmp.le.s32.totalorder %v1034, %v1029
      %vm1048 = vcmp.le.s32.totalorder %v1034, %v1030
      %vm1049 = vcmp.le.s32.totalorder %v1034, %v1031
      %vm1050 = vcmp.le.s32.totalorder %v1034, %v1032
      %v1051 = vsel %vm1035, %v977, -1e+30
      %v1052 = vsel %vm1036, %v979, -1e+30
      %v1053 = vsel %vm1037, %v982, -1e+30
      %v1054 = vsel %vm1038, %v984, -1e+30
      %v1055 = vsel %vm1039, %v987, -1e+30
      %v1056 = vsel %vm1040, %v989, -1e+30
      %v1057 = vsel %vm1041, %v992, -1e+30
      %v1058 = vsel %vm1042, %v994, -1e+30
      %v1059 = vsel %vm1043, %v997, -1e+30
      %v1060 = vsel %vm1044, %v999, -1e+30
      %v1061 = vsel %vm1045, %v1002, -1e+30
      %v1062 = vsel %vm1046, %v1004, -1e+30
      %v1063 = vsel %vm1047, %v1007, -1e+30
      %v1064 = vsel %vm1048, %v1009, -1e+30
      %v1065 = vsel %vm1049, %v1012, -1e+30
      %v1066 = vsel %vm1050, %v1014, -1e+30
      %1067 = vmax.xlane.f32.xlu0 %v1051
      %v1068 = vpop.xlane.xlu0 %1067
      %1069 = vmax.xlane.f32.xlu0 %v1052
      %v1070 = vpop.xlane.xlu0 %1069
      %1071 = vmax.xlane.f32.xlu0 %v1053
      %v1072 = vpop.xlane.xlu0 %1071
      %1073 = vmax.xlane.f32.xlu0 %v1054
      %v1074 = vpop.xlane.xlu0 %1073
      %1075 = vmax.xlane.f32.xlu0 %v1055
      %v1076 = vpop.xlane.xlu0 %1075
      %1077 = vmax.xlane.f32.xlu0 %v1056
      %v1078 = vpop.xlane.xlu0 %1077
      %1079 = vmax.xlane.f32.xlu0 %v1057
      %v1080 = vpop.xlane.xlu0 %1079
      %1081 = vmax.xlane.f32.xlu0 %v1058
      %v1082 = vpop.xlane.xlu0 %1081
      %1083 = vmax.xlane.f32.xlu0 %v1059
      %v1084 = vpop.xlane.xlu0 %1083
      %1085 = vmax.xlane.f32.xlu0 %v1060
      %v1086 = vpop.xlane.xlu0 %1085
      %1087 = vmax.xlane.f32.xlu0 %v1061
      %v1088 = vpop.xlane.xlu0 %1087
      %1089 = vmax.xlane.f32.xlu0 %v1062
      %v1090 = vpop.xlane.xlu0 %1089
      %1091 = vmax.xlane.f32.xlu0 %v1063
      %v1092 = vpop.xlane.xlu0 %1091
      %1093 = vmax.xlane.f32.xlu0 %v1064
      %v1094 = vpop.xlane.xlu0 %1093
      %1095 = vmax.xlane.f32.xlu0 %v1065
      %v1096 = vpop.xlane.xlu0 %1095
      %1097 = vmax.xlane.f32.xlu0 %v1066
      %v1098 = vpop.xlane.xlu0 %1097
      %v1099 = vsub.f32 %v1051, %v1068
      %v1100 = vsub.f32 %v1052, %v1070
      %v1101 = vsub.f32 %v1053, %v1072
      %v1102 = vsub.f32 %v1054, %v1074
      %v1103 = vsub.f32 %v1055, %v1076
      %v1104 = vsub.f32 %v1056, %v1078
      %v1105 = vsub.f32 %v1057, %v1080
      %v1106 = vsub.f32 %v1058, %v1082
      %v1107 = vsub.f32 %v1059, %v1084
      %v1108 = vsub.f32 %v1060, %v1086
      %v1109 = vsub.f32 %v1061, %v1088
      %v1110 = vsub.f32 %v1062, %v1090
      %v1111 = vsub.f32 %v1063, %v1092
      %v1112 = vsub.f32 %v1064, %v1094
      %v1113 = vsub.f32 %v1065, %v1096
      %v1114 = vsub.f32 %v1066, %v1098
      %v1115 = vmul.f32 %v1099, 1.442695
      %v1116 = vpow.pop %v1115
      %v1117 = vmul.f32 %v1100, 1.442695
      %v1118 = vpow.pop %v1117
      %v1119 = vmul.f32 %v1101, 1.442695
      %v1120 = vpow.pop %v1119
      %v1121 = vmul.f32 %v1102, 1.442695
      %v1122 = vpow.pop %v1121
      %v1123 = vmul.f32 %v1103, 1.442695
      %v1124 = vpow.pop %v1123
      %v1125 = vmul.f32 %v1104, 1.442695
      %v1126 = vpow.pop %v1125
      %v1127 = vmul.f32 %v1105, 1.442695
      %v1128 = vpow.pop %v1127
      %v1129 = vmul.f32 %v1106, 1.442695
      %v1130 = vpow.pop %v1129
      %v1131 = vmul.f32 %v1107, 1.442695
      %v1132 = vpow.pop %v1131
      %v1133 = vmul.f32 %v1108, 1.442695
      %v1134 = vpow.pop %v1133
      %v1135 = vmul.f32 %v1109, 1.442695
      %v1136 = vpow.pop %v1135
      %v1137 = vmul.f32 %v1110, 1.442695
      %v1138 = vpow.pop %v1137
      %v1139 = vmul.f32 %v1111, 1.442695
      %v1140 = vpow.pop %v1139
      %v1141 = vmul.f32 %v1112, 1.442695
      %v1142 = vpow.pop %v1141
      %v1143 = vmul.f32 %v1113, 1.442695
      %v1144 = vpow.pop %v1143
      %v1145 = vmul.f32 %v1114, 1.442695
      %v1146 = vpow.pop %v1145
      %1147 = vadd.xlane.f32.xlu0 %v1116
      %v1148 = vpop.xlane.xlu0 %1147
      %1149 = vadd.xlane.f32.xlu0 %v1118
      %v1150 = vpop.xlane.xlu0 %1149
      %1151 = vadd.xlane.f32.xlu0 %v1120
      %v1152 = vpop.xlane.xlu0 %1151
      %1153 = vadd.xlane.f32.xlu0 %v1122
      %v1154 = vpop.xlane.xlu0 %1153
      %1155 = vadd.xlane.f32.xlu0 %v1124
      %v1156 = vpop.xlane.xlu0 %1155
      %1157 = vadd.xlane.f32.xlu0 %v1126
      %v1158 = vpop.xlane.xlu0 %1157
      %1159 = vadd.xlane.f32.xlu0 %v1128
      %v1160 = vpop.xlane.xlu0 %1159
      %1161 = vadd.xlane.f32.xlu0 %v1130
      %v1162 = vpop.xlane.xlu0 %1161
      %1163 = vadd.xlane.f32.xlu0 %v1132
      %v1164 = vpop.xlane.xlu0 %1163
      %1165 = vadd.xlane.f32.xlu0 %v1134
      %v1166 = vpop.xlane.xlu0 %1165
      %1167 = vadd.xlane.f32.xlu0 %v1136
      %v1168 = vpop.xlane.xlu0 %1167
      %1169 = vadd.xlane.f32.xlu0 %v1138
      %v1170 = vpop.xlane.xlu0 %1169
      %1171 = vadd.xlane.f32.xlu0 %v1140
      %v1172 = vpop.xlane.xlu0 %1171
      %1173 = vadd.xlane.f32.xlu0 %v1142
      %v1174 = vpop.xlane.xlu0 %1173
      %1175 = vadd.xlane.f32.xlu0 %v1144
      %v1176 = vpop.xlane.xlu0 %1175
      %1177 = vadd.xlane.f32.xlu0 %v1146
      %v1178 = vpop.xlane.xlu0 %1177
      %v1179 = vrcp.pop %v1148
      %v1180 = vrcp.pop %v1150
      %v1181 = vrcp.pop %v1152
      %v1182 = vrcp.pop %v1154
      %v1183 = vrcp.pop %v1156
      %v1184 = vrcp.pop %v1158
      %v1185 = vrcp.pop %v1160
      %v1186 = vrcp.pop %v1162
      %v1187 = vrcp.pop %v1164
      %v1188 = vrcp.pop %v1166
      %v1189 = vrcp.pop %v1168
      %v1190 = vrcp.pop %v1170
      %v1191 = vrcp.pop %v1172
      %v1192 = vrcp.pop %v1174
      %v1193 = vrcp.pop %v1176
      %v1194 = vrcp.pop %v1178
      %v1195 = vmul.f32 %v1116, %v1179
      %v1196 = vmul.f32 %v1118, %v1180
      %v1197 = vmul.f32 %v1120, %v1181
      %v1198 = vmul.f32 %v1122, %v1182
      %v1199 = vmul.f32 %v1124, %v1183
      %v1200 = vmul.f32 %v1126, %v1184
      %v1201 = vmul.f32 %v1128, %v1185
      %v1202 = vmul.f32 %v1130, %v1186
      %v1203 = vmul.f32 %v1132, %v1187
      %v1204 = vmul.f32 %v1134, %v1188
      %v1205 = vmul.f32 %v1136, %v1189
      %v1206 = vmul.f32 %v1138, %v1190
      %v1207 = vmul.f32 %v1140, %v1191
      %v1208 = vmul.f32 %v1142, %v1192
      %v1209 = vmul.f32 %v1144, %v1193
      %v1210 = vmul.f32 %v1146, %v1194
      %v1211 = vpack.c.bf16 %v1196, %v1195
      %v1212 = vpack.c.bf16 %v1198, %v1197
      %v1213 = vpack.c.bf16 %v1200, %v1199
      %v1214 = vpack.c.bf16 %v1202, %v1201
      %v1215 = vpack.c.bf16 %v1204, %v1203
      %v1216 = vpack.c.bf16 %v1206, %v1205
      %v1217 = vpack.c.bf16 %v1208, %v1207
      %v1218 = vpack.c.bf16 %v1210, %v1209
      %v1219 = vpack.c.bf16 %v849, %v847
      %v1220 = vpack.c.bf16 %v854, %v852
      %v1221 = vpack.c.bf16 %v859, %v857
      %v1222 = vpack.c.bf16 %v864, %v862
      %v1223 = vpack.c.bf16 %v869, %v867
      %v1224 = vpack.c.bf16 %v874, %v872
      %v1225 = vpack.c.bf16 %v879, %v877
      %v1226 = vpack.c.bf16 %v884, %v882
      %1227 = vmatpush.bf16.msra.mxu0 %v1226
      %1228 = vmatpush.bf16.msra.mxu0 %v1225
      %1229 = vmatpush.bf16.msra.mxu0 %v1224
      %1230 = vmatpush.bf16.msra.mxu0 %v1223
      %1231 = vmatpush.bf16.msra.mxu0 %v1222
      %1232 = vmatpush.bf16.msra.mxu0 %v1221
      %1233 = vmatpush.bf16.msra.mxu0 %v1220
      %1234 = vmatpush.bf16.msra.mxu0 %v1219
      %1235 = vmatmul.bf16.gmra.mxu0 %v1211
      %v1236 = vpop.f32.mrf.mxu0
      %v1237 = vadd.f32 0.0, %v1236
      %v1238 = vpop.f32.mrf.mxu0
      %v1239 = vadd.f32 0.0, %v1238
      %1240 = vmatmul.bf16.gmra.mxu0 %v1212
      %v1241 = vpop.f32.mrf.mxu0
      %v1242 = vadd.f32 0.0, %v1241
      %v1243 = vpop.f32.mrf.mxu0
      %v1244 = vadd.f32 0.0, %v1243
      %1245 = vmatmul.bf16.gmra.mxu0 %v1213
      %v1246 = vpop.f32.mrf.mxu0
      %v1247 = vadd.f32 0.0, %v1246
      %v1248 = vpop.f32.mrf.mxu0
      %v1249 = vadd.f32 0.0, %v1248
      %1250 = vmatmul.bf16.gmra.mxu0 %v1214
      %v1251 = vpop.f32.mrf.mxu0
      %v1252 = vadd.f32 0.0, %v1251
      %v1253 = vpop.f32.mrf.mxu0
      %v1254 = vadd.f32 0.0, %v1253
      %1255 = vmatmul.bf16.gmra.mxu0 %v1215
      %v1256 = vpop.f32.mrf.mxu0
      %v1257 = vadd.f32 0.0, %v1256
      %v1258 = vpop.f32.mrf.mxu0
      %v1259 = vadd.f32 0.0, %v1258
      %1260 = vmatmul.bf16.gmra.mxu0 %v1216
      %v1261 = vpop.f32.mrf.mxu0
      %v1262 = vadd.f32 0.0, %v1261
      %v1263 = vpop.f32.mrf.mxu0
      %v1264 = vadd.f32 0.0, %v1263
      %1265 = vmatmul.bf16.gmra.mxu0 %v1217
      %v1266 = vpop.f32.mrf.mxu0
      %v1267 = vadd.f32 0.0, %v1266
      %v1268 = vpop.f32.mrf.mxu0
      %v1269 = vadd.f32 0.0, %v1268
      %1270 = vmatmul.bf16.gmra.mxu0 %v1218
      %v1271 = vpop.f32.mrf.mxu0
      %v1272 = vadd.f32 0.0, %v1271
      %v1273 = vpop.f32.mrf.mxu0
      %v1274 = vadd.f32 0.0, %v1273
      %1275 = vdwg.mxu0
      %1276 = vst.msk [vmem:[%s143] sm:$0xff] %vm918, %v1237
      %1277 = vst.msk [vmem:[%s143 + $0x8] sm:$0xff] %vm918, %v1239
      %1278 = vst.msk [vmem:[%s143 + $0x10] sm:$0xff] %vm918, %v1242
      %1279 = vst.msk [vmem:[%s143 + $0x18] sm:$0xff] %vm918, %v1244
      %1280 = vst.msk [vmem:[%s143 + $0x20] sm:$0xff] %vm918, %v1247
      %1281 = vst.msk [vmem:[%s143 + $0x28] sm:$0xff] %vm918, %v1249
      %1282 = vst.msk [vmem:[%s143 + $0x30] sm:$0xff] %vm918, %v1252
      %1283 = vst.msk [vmem:[%s143 + $0x38] sm:$0xff] %vm918, %v1254
      %1284 = vst.msk [vmem:[%s143 + $0x40] sm:$0xff] %vm918, %v1257
      %1285 = vst.msk [vmem:[%s143 + $0x48] sm:$0xff] %vm918, %v1259
      %1286 = vst.msk [vmem:[%s143 + $0x50] sm:$0xff] %vm918, %v1262
      %1287 = vst.msk [vmem:[%s143 + $0x58] sm:$0xff] %vm918, %v1264
      %1288 = vst.msk [vmem:[%s143 + $0x60] sm:$0xff] %vm918, %v1267
      %1289 = vst.msk [vmem:[%s143 + $0x68] sm:$0xff] %vm918, %v1269
      %1290 = vst.msk [vmem:[%s143 + $0x70] sm:$0xff] %vm918, %v1272
      %1291 = vst.msk [vmem:[%s143 + $0x78] sm:$0xff] %vm918, %v1274
      %p1292 = scmp.lt.s32.totalorder %s13, 1
      %s1293 = scalar_select %p1292, %s13, 1
      %s1294 = smul.addr %s1293, 16
      %s1295 = smul.addr %s1294, 8
      %s1296 = scalar_lea.vmem %s2, %s1295
      // Predicated region
      $region29: #{tpu_custom_call.1} parent=27 // pred_check
        %p1297 = pneg %p78
      $region30: #{tpu_custom_call.1} parent=27 // pred_check_branch
        %1299 = sbr.rel (%p1297) target = $region32
      $region31: #{tpu_custom_call.1} parent=27 // pred_region
        _
      $region32: #{tpu_custom_call.1} parent=27 // pred_fallthru
        _
    $region28: #{tpu_custom_call.1} parent=5 // pred_fallthru
      _
    %p1300 = scmp.le.s32.totalorder 2, %s8
    // Predicated region
    $region33: #{tpu_custom_call.1} parent=5 // pred_check
      %p1301 = pneg %p1300
    $region34: #{tpu_custom_call.1} parent=5 // pred_check_branch
      %1303 = sbr.rel (%p1301) target = $region36
    $region35: #{tpu_custom_call.1} parent=5 // pred_region
      %s1304 = ssub.s32 %s8, 2
      // Predicated region
      $region37: #{tpu_custom_call.1} parent=35 // pred_check
        %p1305 = pneg %p84
      $region38: #{tpu_custom_call.1} parent=35 // pred_check_branch
        %1307 = sbr.rel (%p1305) target = $region40
      $region39: #{tpu_custom_call.1} parent=35 // pred_region
        %p1308 = scmp.lt.s32.totalorder %s14, 1
        %s1309 = scalar_select %p1308, %s14, 1
        %s1310 = smul.addr %s1309, 16
        %s1311 = smul.addr %s1310, 8
        %s1312 = scalar_lea.vmem %s2, %s1311
      $region40: #{tpu_custom_call.1} parent=35 // pred_fallthru
        _
    $region36: #{tpu_custom_call.1} parent=5 // pred_fallthru
      _
  $region6: #{tpu_custom_call.1} parent=0 // loop_footer
    %s12 = sadd.s32 1, %s8
  $region7: #{tpu_custom_call.1} parent=0 // loop_footer_branch
    %7 = sbr.rel target = $region3
  $region8: #{tpu_custom_call.1} parent=0 // loop_exit
    _

</llo_original>
